<compile_context>
chip_gen: v7x
topology: tpu7x:2x2x1
jax: 0.10.0
libtpu: 0.0.40
codegen_flags: <defaults>
</compile_context>

<pallas_src>
import math

import jax
import jax.numpy as jnp
from jax.experimental import pallas as pl
from jax.experimental.pallas import tpu as pltpu


def graph_norm_kernel(x_ref, w_ref, b_ref, oms_ref, o_ref):
    # x_ref/o_ref: (TILE_R, LANE); w/b/oms: (1, LANE) rows broadcast over sublanes.
    x = x_ref[...].astype(jnp.float32)
    # batch_list == ones(bs)  =>  segment mean == x  =>  sub = x * (1 - mean_scale)
    sub = x * oms_ref[...]
    inv_std = jax.lax.rsqrt(sub * sub + 1e-6)          # one EUP op, no divide
    o_ref[...] = (w_ref[...] * sub * inv_std + b_ref[...]).astype(o_ref.dtype)


def graph_norm(x, weight, bias, mean_scale, *, target_tile_bytes=2 * 1024 * 1024):
    """x: (bs, k, c). weight/bias/mean_scale: (c,). Returns (bs, k, c)."""
    bs, k, c = x.shape
    total = bs * k * c
    itemsize = jnp.dtype(x.dtype).itemsize

    # Pick a lane width that is a multiple of 128 (lane-dense, unmasked vst)
    # and a multiple of c (so tiled per-channel params stay aligned).
    lane = c
    if c % 128 != 0:
        cand = (c * 128) // math.gcd(c, 128)           # lcm(c, 128)
        if total % cand == 0:
            lane = cand
    rows = total // lane
    reps = lane // c

    x2 = x.reshape(rows, lane)
    one_minus_ms = (1.0 - mean_scale.astype(jnp.float32))
    w2 = jnp.tile(weight.astype(jnp.float32), reps).reshape(1, lane)
    b2 = jnp.tile(bias.astype(jnp.float32), reps).reshape(1, lane)
    oms2 = jnp.tile(one_minus_ms, reps).reshape(1, lane)

    # ~2 MiB per tile -> ~8 MiB double-buffered in+out; safe on every generation.
    tile_r = max(8, (target_tile_bytes // (lane * itemsize)) // 8 * 8)
    if rows <= tile_r:
        tile_r = rows                                  # full extent (no sublane pad needed)
    grid_r = pl.cdiv(rows, tile_r)

    out2 = pl.pallas_call(
        graph_norm_kernel,
        out_shape=jax.ShapeDtypeStruct((rows, lane), x.dtype),
        grid=(grid_r,),
        in_specs=[
            pl.BlockSpec((tile_r, lane), lambda i: (i, 0)),   # x row tile
            pl.BlockSpec((1, lane), lambda i: (0, 0)),        # weight        (resident)
            pl.BlockSpec((1, lane), lambda i: (0, 0)),        # bias          (resident)
            pl.BlockSpec((1, lane), lambda i: (0, 0)),        # 1-mean_scale  (resident)
        ],
        out_specs=pl.BlockSpec((tile_r, lane), lambda i: (i, 0)),
        compiler_params=pltpu.CompilerParams(
            dimension_semantics=("parallel",),
            vmem_limit_bytes=32 * 1024 * 1024,
        ),
    )(x2, w2, b2, oms2)

    return out2.reshape(bs, k, c)


def graph_norm_ref(x, weight, bias, mean_scale):
    """Pure-JAX mirror of the PyTorch 'gn' forward (batch_list == ones(bs))."""
    mean = x  # scatter_add with one graph per batch element reproduces x
    sub = x - mean * mean_scale[None, None, :]
    std = jnp.sqrt(sub ** 2 + 1e-6)
    return weight[None, None, :] * sub / std + bias[None, None, :]


if __name__ == "__main__":
    key = jax.random.PRNGKey(0)
    bs, k, hidden_dim = 2, 8, 32

    kx, kw, kb, km = jax.random.split(key, 4)
    x = jax.random.normal(kx, (bs, k, hidden_dim), dtype=jnp.float32)

    # Parameters are ones/zeros/ones in __init__; perturb deterministically so
    # the output is non-degenerate while keeping the (hidden_dim,) shapes.
    weight = jnp.ones((hidden_dim,), jnp.float32) + 0.1 * jax.random.normal(kw, (hidden_dim,))
    bias = jnp.zeros((hidden_dim,), jnp.float32) + 0.1 * jax.random.normal(kb, (hidden_dim,))
    mean_scale = jnp.ones((hidden_dim,), jnp.float32) + 0.1 * jax.random.normal(km, (hidden_dim,))

    out = jax.block_until_ready(graph_norm(x, weight, bias, mean_scale))
    ref = graph_norm_ref(x, weight, bias, mean_scale)

    assert out.shape == (bs, k, hidden_dim)
    assert jnp.allclose(out, ref, atol=1e-4, rtol=1e-4), "mismatch vs reference"

    print("KERNEL_OK")
</pallas_src>

<mosaic_0001>
module attributes {stable_mosaic.version = 11 : i64} {
  func.func @graph_norm_kernel(%arg0: i32, %arg1: memref<4x128xf32, #tpu.memory_space<vmem>>, %arg2: memref<1x128xf32, #tpu.memory_space<vmem>>, %arg3: memref<1x128xf32, #tpu.memory_space<vmem>>, %arg4: memref<1x128xf32, #tpu.memory_space<vmem>>, %arg5: memref<4x128xf32, #tpu.memory_space<vmem>>) attributes {dimension_semantics = [#tpu.dimension_semantics<parallel>], iteration_bounds = array<i64: 1>, scalar_prefetch = 0 : i64, scratch_operands = 0 : i64, tpu.core_type = #tpu.core_type<tc>, window_params = [{transform_indices = @transform_0, window_bounds = array<i64: 4, 128>}, {pipeline_mode = #tpu.pipeline_mode<synchronous>, transform_indices = @transform_1, window_bounds = array<i64: 1, 128>}, {pipeline_mode = #tpu.pipeline_mode<synchronous>, transform_indices = @transform_2, window_bounds = array<i64: 1, 128>}, {pipeline_mode = #tpu.pipeline_mode<synchronous>, transform_indices = @transform_3, window_bounds = array<i64: 1, 128>}, {transform_indices = @transform_4, window_bounds = array<i64: 4, 128>}]} {
    %c0 = arith.constant 0 : index
    %c0_0 = arith.constant 0 : index
    %0 = vector.load %arg1[%c0, %c0_0] : memref<4x128xf32, #tpu.memory_space<vmem>>, vector<4x128xf32>
    %c0_1 = arith.constant 0 : index
    %c0_2 = arith.constant 0 : index
    %1 = vector.load %arg4[%c0_1, %c0_2] : memref<1x128xf32, #tpu.memory_space<vmem>>, vector<1x128xf32>
    %2 = vector.broadcast %1 : vector<1x128xf32> to vector<4x128xf32>
    %3 = arith.mulf %0, %2 : vector<4x128xf32>
    %4 = arith.mulf %3, %3 : vector<4x128xf32>
    %cst = arith.constant 9.99999997E-7 : f32
    %5 = vector.broadcast %cst : f32 to vector<4x128xf32>
    %6 = arith.addf %4, %5 : vector<4x128xf32>
    %7 = math.rsqrt %6 : vector<4x128xf32>
    %c0_3 = arith.constant 0 : index
    %c0_4 = arith.constant 0 : index
    %8 = vector.load %arg2[%c0_3, %c0_4] : memref<1x128xf32, #tpu.memory_space<vmem>>, vector<1x128xf32>
    %9 = vector.broadcast %8 : vector<1x128xf32> to vector<4x128xf32>
    %10 = arith.mulf %9, %3 : vector<4x128xf32>
    %11 = arith.mulf %10, %7 : vector<4x128xf32>
    %c0_5 = arith.constant 0 : index
    %c0_6 = arith.constant 0 : index
    %12 = vector.load %arg3[%c0_5, %c0_6] : memref<1x128xf32, #tpu.memory_space<vmem>>, vector<1x128xf32>
    %13 = vector.broadcast %12 : vector<1x128xf32> to vector<4x128xf32>
    %14 = arith.addf %11, %13 : vector<4x128xf32>
    %c0_7 = arith.constant 0 : index
    %c0_8 = arith.constant 0 : index
    %15 = vector.load %arg5[%c0_7, %c0_8] : memref<4x128xf32, #tpu.memory_space<vmem>>, vector<4x128xf32>
    tpu.vector_store %arg5[%c0_7, %c0_8], %14 {strides = array<i32>} : memref<4x128xf32, #tpu.memory_space<vmem>>, vector<4x128xf32>,
    return
  }
  func.func @transform_0(%arg0: i32) -> (i32, i32) {
    %c0_i32 = arith.constant 0 : i32
    %c0_i32_0 = arith.constant 0 : i32
    return %arg0, %c0_i32 : i32, i32
  }
  func.func @transform_1(%arg0: i32) -> (i32, i32) {
    %c0_i32 = arith.constant 0 : i32
    %c0_i32_0 = arith.constant 0 : i32
    %c0_i32_1 = arith.constant 0 : i32
    return %c0_i32, %c0_i32_0 : i32, i32
  }
  func.func @transform_2(%arg0: i32) -> (i32, i32) {
    %c0_i32 = arith.constant 0 : i32
    %c0_i32_0 = arith.constant 0 : i32
    %c0_i32_1 = arith.constant 0 : i32
    return %c0_i32, %c0_i32_0 : i32, i32
  }
  func.func @transform_3(%arg0: i32) -> (i32, i32) {
    %c0_i32 = arith.constant 0 : i32
    %c0_i32_0 = arith.constant 0 : i32
    %c0_i32_1 = arith.constant 0 : i32
    return %c0_i32, %c0_i32_0 : i32, i32
  }
  func.func @transform_4(%arg0: i32) -> (i32, i32) {
    %c0_i32 = arith.constant 0 : i32
    %c0_i32_0 = arith.constant 0 : i32
    return %arg0, %c0_i32 : i32, i32
  }
}

</mosaic_0001>

<llo_original>
// kernel: tpu_custom_call.1
$region0: #{tpu_custom_call.1}
  #allocation0 [shape = 'u32[]', space=smem, size = 0x4, offset = 0x4, fixed_abs, tag = 'smem constant byte address 0x4 - core index']
  #allocation1 [shape = 'u32[144,128]{1,0:T(1,128)}', space=vmem, size = 0x12000, scoped, tag = 'internal scratch']
  %s0 = inlined_call_operand.hbm [shape: f32[4,128], index: 0, kind: input, shape index: {}]
  %s1 = inlined_call_operand.vmem [shape: f32[1,128], index: 1, kind: input, shape index: {}]
  %s2 = inlined_call_operand.vmem [shape: f32[1,128], index: 2, kind: input, shape index: {}]
  %s3 = inlined_call_operand.vmem [shape: f32[1,128], index: 3, kind: input, shape index: {}]
  %s4 = inlined_call_operand.hbm [shape: f32[4,128], index: 4, kind: output, shape index: {}]
  %s5 = sld [smem:[#allocation0]]
  $region30: #{tpu_custom_call.1} parent=0
    _
  %s7 = ssub.s32 1, %s5
  %s8 = scalar_select 0, %s7, %s5
  $region1: #{tpu_custom_call.1} parent=0
    #allocation2 [shape = 'u8[2048]{0}', space=vmem, size = 0x800, scoped, tag = 'input window, operand 0, single buffered']
    #allocation3 [shape = 's32[1]{0}', space=sflag, size = 0x4, scoped, tag = 'scoped memory for tpu_custom_call.1']
    #allocation4 [shape = 's32[1]{0}', space=sflag, size = 0x4, scoped, tag = 'scoped memory for tpu_custom_call.1']
    #allocation5 [shape = 'u8[2048]{0}', space=vmem, size = 0x800, scoped, tag = 'output window, operand 0, single buffered']
    %9 = vsyncpa [#allocation3], 0
    %10 = vsyncpa [#allocation4], 0
    // Predicated region
    $region2: #{tpu_custom_call.1} parent=1 // pred_check
      _
    $region3: #{tpu_custom_call.1} parent=1 // pred_check_branch
      %12 = sbr.rel (0) target = $region5
    $region4: #{tpu_custom_call.1} parent=1 // pred_region
      %s14 = ssub.s32 64, 64
      %15 = vsyncadd [#allocation3], %s14
      %s17 = sshll.u32 [#allocation2], 4
      %s18 = int_to_ptr.vmem [resolvable:$true] %s17
      %20 = dma.hbm_to_vmem [thread:$0]  %s0, 64, %s18, [#allocation3]
    $region5: #{tpu_custom_call.1} parent=1 // pred_fallthru
      _
    // Predicated region
    $region6: #{tpu_custom_call.1} parent=1 // pred_check
      _
    $region7: #{tpu_custom_call.1} parent=1 // pred_check_branch
      %22 = sbr.rel (0) target = $region9
    $region8: #{tpu_custom_call.1} parent=1 // pred_region
      _
    $region9: #{tpu_custom_call.1} parent=1 // pred_fallthru
      _
    // Predicated region
    $region10: #{tpu_custom_call.1} parent=1 // pred_check
      _
    $region11: #{tpu_custom_call.1} parent=1 // pred_check_branch
      %24 = sbr.rel (0) target = $region13
    $region12: #{tpu_custom_call.1} parent=1 // pred_region
      _
    $region13: #{tpu_custom_call.1} parent=1 // pred_fallthru
      _
    // Predicated region
    $region14: #{tpu_custom_call.1} parent=1 // pred_check
      _
    $region15: #{tpu_custom_call.1} parent=1 // pred_check_branch
      %26 = sbr.rel (0) target = $region17
    $region16: #{tpu_custom_call.1} parent=1 // pred_region
      _
    $region17: #{tpu_custom_call.1} parent=1 // pred_fallthru
      _
    // Predicated region
    $region18: #{tpu_custom_call.1} parent=1 // pred_check
      _
    $region19: #{tpu_custom_call.1} parent=1 // pred_check_branch
      %28 = sbr.rel (0) target = $region21
    $region20: #{tpu_custom_call.1} parent=1 // pred_region
      %29 = dma.done [#allocation3], 64
    $region21: #{tpu_custom_call.1} parent=1 // pred_fallthru
      _
    %v30 = vld [vmem:[#allocation2] sm:$0xf]
    %v31 = vld [vmem:[%s3] sm:$0x1]
    %v33 = vlaneseq
    %v34 = vshrl.u32 %v33, 7
    %v35 = vsub.s32 0, %v34
    %v36 = vrot.slane %v31, %v35
    %v38 = vmul.f32 %v30, %v36
    %v39 = vmul.f32 %v38, %v38
    %v40 = vadd.f32 %v39, 1e-06
    %v41 = vrsqrt.pop %v40
    %v42 = vld [vmem:[%s1] sm:$0x1]
    %v44 = vlaneseq
    %v45 = vshrl.u32 %v44, 7
    %v46 = vsub.s32 0, %v45
    %v47 = vrot.slane %v42, %v46
    %v49 = vmul.f32 %v47, %v38
    %v50 = vmul.f32 %v49, %v41
    %v51 = vld [vmem:[%s2] sm:$0x1]
    %v53 = vlaneseq
    %v54 = vshrl.u32 %v53, 7
    %v55 = vsub.s32 0, %v54
    %v56 = vrot.slane %v51, %v55
    %v58 = vadd.f32 %v50, %v56
    %59 = vst [vmem:[#allocation5] sm:$0xf] %v58
    // Predicated region
    $region22: #{tpu_custom_call.1} parent=1 // pred_check
      _
    $region23: #{tpu_custom_call.1} parent=1 // pred_check_branch
      %61 = sbr.rel (0) target = $region25
    $region24: #{tpu_custom_call.1} parent=1 // pred_region
      %s63 = ssub.s32 64, 64
      %64 = vsyncadd [#allocation4], %s63
      %s66 = sshll.u32 [#allocation5], 4
      %s67 = int_to_ptr.vmem [resolvable:$true] %s66
      %69 = dma.vmem_to_hbm [thread:$0]  %s67, 64, %s4, [#allocation4]
    $region25: #{tpu_custom_call.1} parent=1 // pred_fallthru
      _
    // Predicated region
    $region26: #{tpu_custom_call.1} parent=1 // pred_check
      _
    $region27: #{tpu_custom_call.1} parent=1 // pred_check_branch
      %71 = sbr.rel (0) target = $region29
    $region28: #{tpu_custom_call.1} parent=1 // pred_region
      %72 = dma.done [#allocation4], 64
    $region29: #{tpu_custom_call.1} parent=1 // pred_fallthru
      _
    %73 = vsyncpa [#allocation3], 1
    %74 = vsyncpa [#allocation4], 1

</llo_original>
